<compile_context>
chip_gen: v7x
topology: tpu7x:2x2x1
jax: 0.10.0
libtpu: 0.0.40
codegen_flags: <defaults>
</compile_context>

<pallas_src>
import jax
import jax.numpy as jnp
from jax.experimental import pallas as pl
from jax.experimental.pallas import tpu as pltpu

NEGATIVE_SLOPE = 0.01
C_IN = 14
C_OUT = 25

_L_TILE_TARGET = 65536                 # lane elements per grid step (long-L path)
_VMEM_LIMIT_BYTES = 48 * 1024 * 1024   # ~2x headroom over the 24 MiB double-buffered blocks


def _round_up(x, m):
    return ((x + m - 1) // m) * m


def _pick_tiling(length, target, min_tiles=1):
    """Pick (tile, ntiles): tile is a multiple of 128, tile*ntiles >= length,
    with padding waste bounded by ~128*ntiles elements (not a whole tile)."""
    lp = _round_up(length, 128)
    ntiles = max(min_tiles, pl.cdiv(lp, target))
    tile = _round_up(pl.cdiv(lp, ntiles), 128)
    return tile, ntiles


def _convt1x1_leaky_kernel_ncl(x_ref, wt_ref, b_ref, o_ref):
    # x_ref : (1, C_IN, L_TILE)   input tile, L on lanes
    # wt_ref: (C_OUT, C_IN)       transposed weight (VMEM-resident)
    # b_ref : (C_OUT, 1)          bias, broadcast along lanes
    # o_ref : (1, C_OUT, L_TILE)  output tile, lane-dense stores
    x = x_ref[0]                                                        # (C_IN, L_TILE)
    v1 = jnp.dot(wt_ref[...], x, preferred_element_type=jnp.float32)   # (C_OUT, L_TILE)
    v1 = v1 + b_ref[...]
    o_ref[0] = jnp.maximum(v1, v1 * NEGATIVE_SLOPE).astype(o_ref.dtype)


def _convt1x1_leaky_kernel_2d(x_ref, wt_ref, b_ref, o_ref):
    # x_ref : (C_IN, M_TILE)   folded (N*L) on lanes
    # o_ref : (C_OUT, M_TILE)
    v1 = jnp.dot(wt_ref[...], x_ref[...], preferred_element_type=jnp.float32)
    v1 = v1 + b_ref[...]
    o_ref[...] = jnp.maximum(v1, v1 * NEGATIVE_SLOPE).astype(o_ref.dtype)


def convt1x1_leaky_relu(x_ncl, weight, bias, l_tile_target=_L_TILE_TARGET):
    """
    x_ncl:  (N, C_IN, L)  float32   (PyTorch NCL layout)
    weight: (C_IN, C_OUT) float32   (ConvTranspose1d weight (C_in, C_out, 1) squeezed)
    bias:   (C_OUT,)      float32
    returns (N, C_OUT, L) float32
    """
    N, Cin, L = x_ncl.shape
    assert Cin == C_IN

    wT = jnp.transpose(weight)        # (C_OUT, C_IN) — ~1.4 KB, one-time
    b2d = bias.reshape(C_OUT, 1)

    if L < 128:
        # ---- small-L path: fold N onto lanes, single lane-dense 2-D matmul ----
        M = N * L
        x2d = jnp.transpose(x_ncl, (1, 0, 2)).reshape(C_IN, M)
        m_tile, ntiles = _pick_tiling(M, l_tile_target)
        Mp = m_tile * ntiles
        if Mp != M:
            x2d = jnp.pad(x2d, ((0, 0), (0, Mp - M)))

        out2d = pl.pallas_call(
            _convt1x1_leaky_kernel_2d,
            out_shape=jax.ShapeDtypeStruct((C_OUT, Mp), jnp.float32),
            grid_spec=pl.GridSpec(
                grid=(ntiles,),
                in_specs=[
                    pl.BlockSpec((C_IN, m_tile), lambda j: (0, j)),
                    pl.BlockSpec((C_OUT, C_IN), lambda j: (0, 0)),
                    pl.BlockSpec((C_OUT, 1), lambda j: (0, 0)),
                ],
                out_specs=pl.BlockSpec((C_OUT, m_tile), lambda j: (0, j)),
            ),
            compiler_params=pltpu.CompilerParams(
                dimension_semantics=("parallel",),
                vmem_limit_bytes=_VMEM_LIMIT_BYTES,
            ),
            cost_estimate=pl.CostEstimate(
                flops=2 * Mp * C_IN * C_OUT,
                transcendentals=0,
                bytes_accessed=4 * Mp * (C_IN + C_OUT),
            ),
        )(x2d, wT, b2d)

        out2d = out2d[:, :M].reshape(C_OUT, N, L)
        return jnp.transpose(out2d, (1, 0, 2))

    # ---- long-L path: per-batch, large lane tiles along L ----
    # Keep >= 2 L-tiles when N == 1 so both v7x TensorCores get work.
    min_tiles = 2 if (N == 1 and _round_up(L, 128) >= 256) else 1
    l_tile, ntiles = _pick_tiling(L, l_tile_target, min_tiles=min_tiles)
    Lp = l_tile * ntiles
    x_p = x_ncl if Lp == L else jnp.pad(x_ncl, ((0, 0), (0, 0), (0, Lp - L)))

    out_p = pl.pallas_call(
        _convt1x1_leaky_kernel_ncl,
        out_shape=jax.ShapeDtypeStruct((N, C_OUT, Lp), jnp.float32),
        grid_spec=pl.GridSpec(
            grid=(N, ntiles),
            in_specs=[
                pl.BlockSpec((1, C_IN, l_tile), lambda n, j: (n, 0, j)),
                pl.BlockSpec((C_OUT, C_IN), lambda n, j: (0, 0)),
                pl.BlockSpec((C_OUT, 1), lambda n, j: (0, 0)),
            ],
            out_specs=pl.BlockSpec((1, C_OUT, l_tile), lambda n, j: (n, 0, j)),
        ),
        compiler_params=pltpu.CompilerParams(
            dimension_semantics=("parallel", "parallel"),
            vmem_limit_bytes=_VMEM_LIMIT_BYTES,
        ),
        cost_estimate=pl.CostEstimate(
            flops=2 * N * Lp * C_IN * C_OUT,
            transcendentals=0,
            bytes_accessed=4 * N * Lp * (C_IN + C_OUT),
        ),
    )(x_p, wT, b2d)

    return out_p if Lp == L else out_p[:, :, :L]


def _reference(x, weight, bias):
    v = jnp.einsum("ncl,co->nol", x, weight) + bias[None, :, None]
    return jnp.where(v > 0, v, v * NEGATIVE_SLOPE)


if __name__ == "__main__":
    key = jax.random.PRNGKey(0)
    kx, kw, kb, kx2 = jax.random.split(key, 4)

    # Deterministic parameter init (PyTorch-default-like uniform bound).
    bound = 1.0 / jnp.sqrt(jnp.float32(C_IN * 1))
    weight = jax.random.uniform(kw, (C_IN, C_OUT), jnp.float32, -bound, bound)
    bias = jax.random.uniform(kb, (C_OUT,), jnp.float32, -bound, bound)

    # Shape the module's forward implies: (N, C_in=14, L). Small L exercises the folded path.
    N, L = 8, 5
    x = jax.random.normal(kx, (N, C_IN, L), dtype=jnp.float32)
    out = jax.block_until_ready(convt1x1_leaky_relu(x, weight, bias))
    ref = _reference(x, weight, bias)
    assert out.shape == (N, C_OUT, L)
    assert jnp.allclose(out, ref, atol=1e-5, rtol=1e-5)

    # Also exercise the long-L tiled path (still small).
    N2, L2 = 2, 300
    x2 = jax.random.normal(kx2, (N2, C_IN, L2), dtype=jnp.float32)
    out2 = jax.block_until_ready(convt1x1_leaky_relu(x2, weight, bias))
    ref2 = _reference(x2, weight, bias)
    assert out2.shape == (N2, C_OUT, L2)
    assert jnp.allclose(out2, ref2, atol=1e-5, rtol=1e-5)

    print("KERNEL_OK")
</pallas_src>

<mosaic_0001>
module attributes {stable_mosaic.version = 11 : i64} {
  func.func @_convt1x1_leaky_kernel_2d(%arg0: i32, %arg1: memref<14x128xf32, #tpu.memory_space<vmem>>, %arg2: memref<25x14xf32, #tpu.memory_space<vmem>>, %arg3: memref<25x1xf32, #tpu.memory_space<vmem>>, %arg4: memref<25x128xf32, #tpu.memory_space<vmem>>) attributes {dimension_semantics = [#tpu.dimension_semantics<parallel>], iteration_bounds = array<i64: 1>, scalar_prefetch = 0 : i64, scratch_operands = 0 : i64, tpu.core_type = #tpu.core_type<tc>, window_params = [{transform_indices = @transform_0, window_bounds = array<i64: 14, 128>}, {pipeline_mode = #tpu.pipeline_mode<synchronous>, transform_indices = @transform_1, window_bounds = array<i64: 25, 14>}, {pipeline_mode = #tpu.pipeline_mode<synchronous>, transform_indices = @transform_2, window_bounds = array<i64: 25, 1>}, {transform_indices = @transform_3, window_bounds = array<i64: 25, 128>}]} {
    %c0 = arith.constant 0 : index
    %c0_0 = arith.constant 0 : index
    %0 = vector.load %arg2[%c0, %c0_0] : memref<25x14xf32, #tpu.memory_space<vmem>>, vector<25x14xf32>
    %c0_1 = arith.constant 0 : index
    %c0_2 = arith.constant 0 : index
    %1 = vector.load %arg1[%c0_1, %c0_2] : memref<14x128xf32, #tpu.memory_space<vmem>>, vector<14x128xf32>
    %cst = arith.constant dense<0.000000e+00> : vector<25x128xf32>
    %2 = tpu.matmul %0, %1, %cst {dimension_numbers = #tpu.dot_dimension_numbers<[1], [0], [0], [1], [0, 0, 1, 1], [], []>} : vector<25x14xf32>, vector<14x128xf32>, vector<25x128xf32> -> vector<25x128xf32>
    %c0_3 = arith.constant 0 : index
    %c0_4 = arith.constant 0 : index
    %3 = vector.load %arg3[%c0_3, %c0_4] : memref<25x1xf32, #tpu.memory_space<vmem>>, vector<25x1xf32>
    %4 = vector.broadcast %3 : vector<25x1xf32> to vector<25x128xf32>
    %5 = arith.addf %2, %4 : vector<25x128xf32>
    %cst_5 = arith.constant 0.00999999977 : f32
    %6 = vector.broadcast %cst_5 : f32 to vector<25x128xf32>
    %7 = arith.mulf %5, %6 : vector<25x128xf32>
    %8 = arith.maximumf %5, %7 : vector<25x128xf32>
    %c0_6 = arith.constant 0 : index
    %c0_7 = arith.constant 0 : index
    %9 = vector.load %arg4[%c0_6, %c0_7] : memref<25x128xf32, #tpu.memory_space<vmem>>, vector<25x128xf32>
    tpu.vector_store %arg4[%c0_6, %c0_7], %8 {strides = array<i32>} : memref<25x128xf32, #tpu.memory_space<vmem>>, vector<25x128xf32>,
    return
  }
  func.func @transform_0(%arg0: i32) -> (i32, i32) {
    %c0_i32 = arith.constant 0 : i32
    %c0_i32_0 = arith.constant 0 : i32
    return %c0_i32, %arg0 : i32, i32
  }
  func.func @transform_1(%arg0: i32) -> (i32, i32) {
    %c0_i32 = arith.constant 0 : i32
    %c0_i32_0 = arith.constant 0 : i32
    %c0_i32_1 = arith.constant 0 : i32
    return %c0_i32, %c0_i32_0 : i32, i32
  }
  func.func @transform_2(%arg0: i32) -> (i32, i32) {
    %c0_i32 = arith.constant 0 : i32
    %c0_i32_0 = arith.constant 0 : i32
    %c0_i32_1 = arith.constant 0 : i32
    return %c0_i32, %c0_i32_0 : i32, i32
  }
  func.func @transform_3(%arg0: i32) -> (i32, i32) {
    %c0_i32 = arith.constant 0 : i32
    %c0_i32_0 = arith.constant 0 : i32
    return %c0_i32, %arg0 : i32, i32
  }
}

</mosaic_0001>

<llo_original>
// kernel: tpu_custom_call.1
$region0: #{tpu_custom_call.1}
  #allocation0 [shape = 'u32[]', space=smem, size = 0x4, offset = 0x4, fixed_abs, tag = 'smem constant byte address 0x4 - core index']
  #allocation1 [shape = 'u32[144,128]{1,0:T(1,128)}', space=vmem, size = 0x12000, scoped, tag = 'internal scratch']
  %s0 = inlined_call_operand.vmem [shape: f32[14,128], index: 0, kind: input, shape index: {}]
  %s1 = inlined_call_operand.vmem [shape: f32[25,14], index: 1, kind: input, shape index: {}]
  %s2 = inlined_call_operand.vmem [shape: f32[25,1], index: 2, kind: input, shape index: {}]
  %s3 = inlined_call_operand.hbm [shape: f32[25,128], index: 3, kind: output, shape index: {}]
  %s4 = sld [smem:[#allocation0]]
  $region22: #{tpu_custom_call.1} parent=0
    _
  %s6 = ssub.s32 1, %s4
  %s7 = scalar_select 0, %s6, %s4
  $region1: #{tpu_custom_call.1} parent=0
    #allocation2 [shape = 'u8[16384]{0}', space=vmem, size = 0x4000, scoped, tag = 'output window, operand 0, single buffered']
    #allocation3 [shape = 's32[1]{0}', space=sflag, size = 0x4, scoped, tag = 'scoped memory for tpu_custom_call.1']
    %8 = vsyncpa [#allocation3], 0
    // Predicated region
    $region2: #{tpu_custom_call.1} parent=1 // pred_check
      _
    $region3: #{tpu_custom_call.1} parent=1 // pred_check_branch
      %10 = sbr.rel (0) target = $region5
    $region4: #{tpu_custom_call.1} parent=1 // pred_region
      _
    $region5: #{tpu_custom_call.1} parent=1 // pred_fallthru
      _
    // Predicated region
    $region6: #{tpu_custom_call.1} parent=1 // pred_check
      _
    $region7: #{tpu_custom_call.1} parent=1 // pred_check_branch
      %12 = sbr.rel (0) target = $region9
    $region8: #{tpu_custom_call.1} parent=1 // pred_region
      _
    $region9: #{tpu_custom_call.1} parent=1 // pred_fallthru
      _
    // Predicated region
    $region10: #{tpu_custom_call.1} parent=1 // pred_check
      _
    $region11: #{tpu_custom_call.1} parent=1 // pred_check_branch
      %14 = sbr.rel (0) target = $region13
    $region12: #{tpu_custom_call.1} parent=1 // pred_region
      _
    $region13: #{tpu_custom_call.1} parent=1 // pred_fallthru
      _
    %v15 = vld [vmem:[%s1] sm:$0xff]
    %v16 = vld [vmem:[%s1 + $0x8] sm:$0xff]
    %v17 = vld [vmem:[%s1 + $0x10] sm:$0xff]
    %v18 = vld [vmem:[%s1 + $0x18] sm:$0x1]
    %v19 = vld [vmem:[%s0] sm:$0xff]
    %v20 = vld [vmem:[%s0 + $0x8] sm:$0x3f]
    %v21 = vld [vmem:[%s2] sm:$0xff]
    %v22 = vld [vmem:[%s2 + $0x8] sm:$0xff]
    %v23 = vld [vmem:[%s2 + $0x10] sm:$0xff]
    %v24 = vld [vmem:[%s2 + $0x18] sm:$0x1]
    %26 = vset.pattern.permute.xlu0 0
    %27 = vperm.xlu0 %26, %v21
    %v28 = vpop.permute.xlu0 %27
    %31 = vset.pattern.permute.xlu0 0
    %32 = vperm.xlu0 %31, %v22
    %v33 = vpop.permute.xlu0 %32
    %36 = vset.pattern.permute.xlu0 0
    %37 = vperm.xlu0 %36, %v23
    %v38 = vpop.permute.xlu0 %37
    %41 = vset.pattern.permute.xlu0 0
    %42 = vperm.xlu0 %41, %v24
    %v43 = vpop.permute.xlu0 %42
    %vm45 = vcmask 113664
    %v47 = vsel %vm45, %v15, 0
    %v50 = vsel %vm45, %v16, 0
    %v53 = vsel %vm45, %v17, 0
    %v56 = vsel %vm45, %v18, 0
    %vm58 = vcmask 1045504
    %v60 = vsel %vm58, %v20, 0
    %62 = vmatprep.subr.mxu0 0.0
    %63 = vmatpush1.msra.mxu0 %v19
    %64 = vmatprep.subr.mxu0 0.0
    %65 = vmatpush1.msra.mxu0 %v60
    %66 = vmatprep.subr.mxu0 0.0
    %67 = vmatpush1.msra.mxu0 0.0
    %68 = vmatprep.subr.mxu0 0.0
    %69 = vmatpush1.msra.mxu0 0.0
    %70 = vmatprep.subr.mxu0 0.0
    %71 = vmatpush1.msra.mxu0 0.0
    %72 = vmatprep.subr.mxu0 0.0
    %73 = vmatpush1.msra.mxu0 0.0
    %74 = vmatprep.subr.mxu0 0.0
    %75 = vmatpush1.msra.mxu0 0.0
    %76 = vmatprep.subr.mxu0 0.0
    %77 = vmatpush1.msra.mxu0 0.0
    %78 = vmatprep.subr.mxu0 0.0
    %79 = vmatpush1.msra.mxu0 0.0
    %80 = vmatprep.subr.mxu0 0.0
    %81 = vmatpush1.msra.mxu0 0.0
    %82 = vmatprep.subr.mxu0 0.0
    %83 = vmatpush1.msra.mxu0 0.0
    %84 = vmatprep.subr.mxu0 0.0
    %85 = vmatpush1.msra.mxu0 0.0
    %86 = vmatprep.subr.mxu0 0.0
    %87 = vmatpush1.msra.mxu0 0.0
    %88 = vmatprep.subr.mxu0 0.0
    %89 = vmatpush1.msra.mxu0 0.0
    %90 = vmatprep.subr.mxu0 0.0
    %91 = vmatpush1.msra.mxu0 0.0
    %92 = vmatprep.subr.mxu0 0.0
    %93 = vmatpush1.msra.mxu0 0.0
    %94 = vmatprep.subr.mxu0 0.0
    %95 = vmatpush1.msra.mxu0 0.0
    %96 = vmatprep.subr.mxu0 0.0
    %97 = vmatpush1.msra.mxu0 0.0
    %98 = vmatprep.subr.mxu0 0.0
    %99 = vmatpush1.msra.mxu0 0.0
    %100 = vmatprep.subr.mxu0 0.0
    %101 = vmatpush1.msra.mxu0 0.0
    %102 = vmatprep.subr.mxu0 0.0
    %103 = vmatpush1.msra.mxu0 0.0
    %104 = vmatprep.subr.mxu0 0.0
    %105 = vmatpush1.msra.mxu0 0.0
    %106 = vmatprep.subr.mxu0 0.0
    %107 = vmatpush1.msra.mxu0 0.0
    %108 = vmatprep.subr.mxu0 0.0
    %109 = vmatpush1.msra.mxu0 0.0
    %110 = vmatprep.subr.mxu0 0.0
    %111 = vmatpush1.msra.mxu0 0.0
    %112 = vmatprep.subr.mxu0 0.0
    %113 = vmatpush1.msra.mxu0 0.0
    %114 = vmatprep.subr.mxu0 0.0
    %115 = vmatpush1.msra.mxu0 0.0
    %116 = vmatprep.subr.mxu0 0.0
    %117 = vmatpush1.msra.mxu0 0.0
    %118 = vmatprep.subr.mxu0 0.0
    %119 = vmatpush1.msra.mxu0 0.0
    %120 = vmatprep.subr.mxu0 0.0
    %121 = vmatpush1.msra.mxu0 0.0
    %122 = vmatprep.subr.mxu0 0.0
    %123 = vmatpush1.msra.mxu0 0.0
    %124 = vmatprep.subr.mxu0 0.0
    %125 = vmatpush1.msra.mxu0 0.0
    %126 = vmatprep.mubr.f32.mxu0 0.0
    %127 = vmatmul.mubr.f32.gmra.mrb[0].mxu0 %v47
    %v128 = vpop.f32.mrb[0].mxu0
    %v129 = vadd.f32 %v28, %v128
    %v130 = vpop.f32.mrb[0].mxu0
    %131 = vmatprep.mubr.f32.mxu0 0.0
    %132 = vmatmul.mubr.f32.gmra.mrb[0].mxu0 %v50
    %v133 = vpop.f32.mrb[0].mxu0
    %v134 = vadd.f32 %v33, %v133
    %v135 = vpop.f32.mrb[0].mxu0
    %136 = vmatprep.mubr.f32.mxu0 0.0
    %137 = vmatmul.mubr.f32.gmra.mrb[0].mxu0 %v53
    %v138 = vpop.f32.mrb[0].mxu0
    %v139 = vadd.f32 %v38, %v138
    %v140 = vpop.f32.mrb[0].mxu0
    %141 = vmatprep.mubr.f32.mxu0 0.0
    %142 = vmatmul.mubr.f32.gmra.mrb[0].mxu0 %v56
    %v143 = vpop.f32.mrb[0].mxu0
    %v144 = vadd.f32 %v43, %v143
    %v145 = vpop.f32.mrb[0].mxu0
    %146 = vdwg.mxu0
    %v147 = vmul.f32 %v129, 0.01
    %v148 = vmul.f32 %v134, 0.01
    %v149 = vmul.f32 %v139, 0.01
    %v150 = vmul.f32 %v144, 0.01
    %v151 = vmax.f32 %v129, %v147
    %v152 = vmax.f32 %v134, %v148
    %v153 = vmax.f32 %v139, %v149
    %v154 = vmax.f32 %v144, %v150
    %155 = vst [vmem:[#allocation2] sm:$0xff] %v151
    %156 = vst [vmem:[#allocation2 + $0x8] sm:$0xff] %v152
    %157 = vst [vmem:[#allocation2 + $0x10] sm:$0xff] %v153
    %158 = vst [vmem:[#allocation2 + $0x18] sm:$0x1] %v154
    // Predicated region
    $region14: #{tpu_custom_call.1} parent=1 // pred_check
      _
    $region15: #{tpu_custom_call.1} parent=1 // pred_check_branch
      %160 = sbr.rel (0) target = $region17
    $region16: #{tpu_custom_call.1} parent=1 // pred_region
      %s162 = ssub.s32 512, 512
      %163 = vsyncadd [#allocation3], %s162
      %s164 = sshll.u32 [#allocation2], 4
      %s165 = int_to_ptr.vmem [resolvable:$true] %s164
      %170 = dma.vmem_to_hbm [thread:$0]  %s165, 512, %s3, [#allocation3], 128, 128, 8
    $region17: #{tpu_custom_call.1} parent=1 // pred_fallthru
      _
    // Predicated region
    $region18: #{tpu_custom_call.1} parent=1 // pred_check
      _
    $region19: #{tpu_custom_call.1} parent=1 // pred_check_branch
      %172 = sbr.rel (0) target = $region21
    $region20: #{tpu_custom_call.1} parent=1 // pred_region
      %173 = dma.done [#allocation3], 512
    $region21: #{tpu_custom_call.1} parent=1 // pred_fallthru
      _
    %174 = vsyncpa [#allocation3], 1

</llo_original>
